<compile_context>
chip_gen: v6e
topology: v6e:2x2x1
jax: 0.10.0
libtpu: 0.0.40
codegen_flags: <defaults>
</compile_context>

<pallas_src>
import jax
import jax.numpy as jnp
from jax.experimental import pallas as pl
from jax.experimental.pallas import tpu as pltpu


def _layernorm_kernel(x_ref, scale_ref, shift_ref, o_ref):
    # x_ref: (tile_rows, emb_dim) block in VMEM
    x = x_ref[...].astype(jnp.float32)
    emb_dim = x.shape[-1]
    inv_n = jnp.float32(1.0 / emb_dim)
    # Fused single pass: sum(x) and sum(x*x) together -> var = E[x^2] - mean^2.
    s1 = jnp.sum(x, axis=-1, keepdims=True)
    s2 = jnp.sum(x * x, axis=-1, keepdims=True)
    mean = s1 * inv_n
    var = s2 * inv_n - mean * mean          # unbiased=False (biased variance)
    inv_std = jax.lax.rsqrt(var + 1e-5)     # EUP rsqrt
    scale = scale_ref[...].astype(jnp.float32)   # (1, emb_dim), fetched once
    shift = shift_ref[...].astype(jnp.float32)   # (1, emb_dim), fetched once
    o_ref[...] = ((x - mean) * inv_std * scale + shift).astype(o_ref.dtype)


def _round_down(x, m):
    return (x // m) * m


def _round_up(x, m):
    return -(-x // m) * m


def _choose_tile_rows(rows, emb_dim, dtype):
    """Largest row tile (multiple of 8/16) whose f32 working copy stays ~4 MiB."""
    itemsize = jnp.dtype(dtype).itemsize
    row_mult = 16 if itemsize < 4 else 8     # bf16 packs 2 rows / sublane
    target_bytes = 4 * 1024 * 1024           # per in-flight buffer budget (v7x-safe)
    t = target_bytes // (emb_dim * 4)        # f32 compute copy dominates VMEM
    t = max(row_mult, min(1024, t))
    t = _round_down(t, row_mult)
    # Never allocate a tile bigger than the (padded) row count.
    t = min(t, _round_up(rows, row_mult))
    return max(t, row_mult)


def layernorm(x, scale, shift, *, tile_rows=None):
    """x: (..., emb_dim); scale/shift: (emb_dim,). Returns same shape/dtype as x."""
    orig_shape = x.shape
    emb_dim = orig_shape[-1]
    x2 = x.reshape(-1, emb_dim)
    rows = x2.shape[0]

    if tile_rows is None:
        tile_rows = _choose_tile_rows(rows, emb_dim, x2.dtype)

    scale2 = scale.reshape(1, emb_dim)
    shift2 = shift.reshape(1, emb_dim)

    grid = (pl.cdiv(rows, tile_rows),)       # padded last block; rows independent

    # VMEM budget: double-buffered input + output tiles + params, with headroom.
    itemsize = jnp.dtype(x2.dtype).itemsize
    tile_bytes = tile_rows * emb_dim * itemsize
    param_bytes = 2 * emb_dim * jnp.dtype(scale2.dtype).itemsize
    needed = 2 * (tile_bytes + tile_bytes) + 2 * param_bytes
    vmem_limit = int(min(max(2 * needed, 32 * 1024 * 1024), 48 * 1024 * 1024))

    out = pl.pallas_call(
        _layernorm_kernel,
        out_shape=jax.ShapeDtypeStruct((rows, emb_dim), x.dtype),
        grid_spec=pltpu.PrefetchScalarGridSpec(
            num_scalar_prefetch=0,
            grid=grid,
            in_specs=[
                pl.BlockSpec((tile_rows, emb_dim), lambda i: (i, 0)),
                pl.BlockSpec((1, emb_dim), lambda i: (0, 0)),   # constant block,
                pl.BlockSpec((1, emb_dim), lambda i: (0, 0)),   # no re-DMA per step
            ],
            out_specs=pl.BlockSpec((tile_rows, emb_dim), lambda i: (i, 0)),
        ),
        compiler_params=pltpu.CompilerParams(
            dimension_semantics=("parallel",),
            vmem_limit_bytes=vmem_limit,
        ),
    )(x2, scale2, shift2)
    return out.reshape(orig_shape)


def _reference_layernorm(x, scale, shift, eps=1e-5):
    mean = jnp.mean(x, axis=-1, keepdims=True)
    var = jnp.mean((x - mean) ** 2, axis=-1, keepdims=True)
    return scale * ((x - mean) / jnp.sqrt(var + eps)) + shift


if __name__ == "__main__":
    key = jax.random.PRNGKey(0)

    # Main (small) test consistent with the module: batch=2, seq=8, emb_dim=32.
    batch, seq, emb_dim = 2, 8, 32
    x = jax.random.normal(key, (batch, seq, emb_dim), dtype=jnp.float32)
    scale = jnp.ones((emb_dim,), dtype=jnp.float32)   # torch init: ones
    shift = jnp.zeros((emb_dim,), dtype=jnp.float32)  # torch init: zeros

    out = layernorm(x, scale, shift)
    out = jax.block_until_ready(out)
    ref = _reference_layernorm(x, scale, shift)
    assert out.shape == x.shape and out.dtype == x.dtype
    assert jnp.allclose(out, ref, atol=1e-5, rtol=1e-5)

    # Exercise the cdiv-padded last block (rows not a multiple of the tile).
    k1, k2 = jax.random.split(key)
    x2 = jax.random.normal(k1, (3, 5, 128), dtype=jnp.float32)
    s2 = 1.0 + 0.1 * jax.random.normal(k2, (128,), dtype=jnp.float32)
    b2 = 0.05 * jax.random.normal(k1, (128,), dtype=jnp.float32)
    o2 = jax.block_until_ready(layernorm(x2, s2, b2))
    assert jnp.allclose(o2, _reference_layernorm(x2, s2, b2), atol=1e-5, rtol=1e-5)

    # Exercise a multi-step grid (rows > tile_rows) with a padded tail block.
    x3 = jax.random.normal(k2, (4, 300, 128), dtype=jnp.float32)
    o3 = jax.block_until_ready(layernorm(x3, s2, b2))
    assert jnp.allclose(o3, _reference_layernorm(x3, s2, b2), atol=1e-5, rtol=1e-5)

    print("KERNEL_OK")
</pallas_src>

<mosaic_0001>
module attributes {stable_mosaic.version = 11 : i64} {
  func.func @_layernorm_kernel(%arg0: i32, %arg1: memref<16x32xf32, #tpu.memory_space<vmem>>, %arg2: memref<1x32xf32, #tpu.memory_space<vmem>>, %arg3: memref<1x32xf32, #tpu.memory_space<vmem>>, %arg4: memref<16x32xf32, #tpu.memory_space<vmem>>) attributes {dimension_semantics = [#tpu.dimension_semantics<parallel>], iteration_bounds = array<i64: 1>, scalar_prefetch = 0 : i64, scratch_operands = 0 : i64, tpu.core_type = #tpu.core_type<tc>, window_params = [{transform_indices = @transform_0, window_bounds = array<i64: 16, 32>}, {pipeline_mode = #tpu.pipeline_mode<synchronous>, transform_indices = @transform_1, window_bounds = array<i64: 1, 32>}, {pipeline_mode = #tpu.pipeline_mode<synchronous>, transform_indices = @transform_2, window_bounds = array<i64: 1, 32>}, {transform_indices = @transform_3, window_bounds = array<i64: 16, 32>}]} {
    %c0 = arith.constant 0 : index
    %c0_0 = arith.constant 0 : index
    %0 = vector.load %arg1[%c0, %c0_0] : memref<16x32xf32, #tpu.memory_space<vmem>>, vector<16x32xf32>
    %cst = arith.constant dense<0.000000e+00> : vector<16xf32>
    %1 = vector.multi_reduction <add>, %0, %cst [1] : vector<16x32xf32> to vector<16xf32>
    %2 = vector.shape_cast %1 : vector<16xf32> to vector<16x1xf32>
    %3 = arith.mulf %0, %0 : vector<16x32xf32>
    %cst_1 = arith.constant dense<0.000000e+00> : vector<16xf32>
    %4 = vector.multi_reduction <add>, %3, %cst_1 [1] : vector<16x32xf32> to vector<16xf32>
    %5 = vector.shape_cast %4 : vector<16xf32> to vector<16x1xf32>
    %cst_2 = arith.constant 3.125000e-02 : f32
    %6 = vector.broadcast %cst_2 : f32 to vector<16x1xf32>
    %7 = arith.mulf %2, %6 : vector<16x1xf32>
    %cst_3 = arith.constant 3.125000e-02 : f32
    %8 = vector.broadcast %cst_3 : f32 to vector<16x1xf32>
    %9 = arith.mulf %5, %8 : vector<16x1xf32>
    %10 = arith.mulf %7, %7 : vector<16x1xf32>
    %11 = arith.subf %9, %10 : vector<16x1xf32>
    %cst_4 = arith.constant 9.99999974E-6 : f32
    %12 = vector.broadcast %cst_4 : f32 to vector<16x1xf32>
    %13 = arith.addf %11, %12 : vector<16x1xf32>
    %14 = math.rsqrt %13 : vector<16x1xf32>
    %c0_5 = arith.constant 0 : index
    %c0_6 = arith.constant 0 : index
    %15 = vector.load %arg2[%c0_5, %c0_6] : memref<1x32xf32, #tpu.memory_space<vmem>>, vector<1x32xf32>
    %c0_7 = arith.constant 0 : index
    %c0_8 = arith.constant 0 : index
    %16 = vector.load %arg3[%c0_7, %c0_8] : memref<1x32xf32, #tpu.memory_space<vmem>>, vector<1x32xf32>
    %17 = vector.broadcast %7 : vector<16x1xf32> to vector<16x32xf32>
    %18 = arith.subf %0, %17 : vector<16x32xf32>
    %19 = vector.broadcast %14 : vector<16x1xf32> to vector<16x32xf32>
    %20 = arith.mulf %18, %19 : vector<16x32xf32>
    %21 = vector.broadcast %15 : vector<1x32xf32> to vector<16x32xf32>
    %22 = arith.mulf %20, %21 : vector<16x32xf32>
    %23 = vector.broadcast %16 : vector<1x32xf32> to vector<16x32xf32>
    %24 = arith.addf %22, %23 : vector<16x32xf32>
    %c0_9 = arith.constant 0 : index
    %c0_10 = arith.constant 0 : index
    %25 = vector.load %arg4[%c0_9, %c0_10] : memref<16x32xf32, #tpu.memory_space<vmem>>, vector<16x32xf32>
    tpu.vector_store %arg4[%c0_9, %c0_10], %24 {strides = array<i32>} : memref<16x32xf32, #tpu.memory_space<vmem>>, vector<16x32xf32>,
    return
  }
  func.func @transform_0(%arg0: i32) -> (i32, i32) {
    %c0_i32 = arith.constant 0 : i32
    %c0_i32_0 = arith.constant 0 : i32
    return %arg0, %c0_i32 : i32, i32
  }
  func.func @transform_1(%arg0: i32) -> (i32, i32) {
    %c0_i32 = arith.constant 0 : i32
    %c0_i32_0 = arith.constant 0 : i32
    %c0_i32_1 = arith.constant 0 : i32
    return %c0_i32, %c0_i32_0 : i32, i32
  }
  func.func @transform_2(%arg0: i32) -> (i32, i32) {
    %c0_i32 = arith.constant 0 : i32
    %c0_i32_0 = arith.constant 0 : i32
    %c0_i32_1 = arith.constant 0 : i32
    return %c0_i32, %c0_i32_0 : i32, i32
  }
  func.func @transform_3(%arg0: i32) -> (i32, i32) {
    %c0_i32 = arith.constant 0 : i32
    %c0_i32_0 = arith.constant 0 : i32
    return %arg0, %c0_i32 : i32, i32
  }
}

</mosaic_0001>

<llo_original>
// kernel: tpu_custom_call.1
$region0: #{tpu_custom_call.1}
  #allocation0 [shape = 'u32[]', space=smem, size = 0x4, offset = 0x4, fixed_abs, tag = 'smem constant byte address 0x4 - core index']
  #allocation1 [shape = 'u32[144,128]{1,0:T(1,128)}', space=vmem, size = 0x12000, scoped, tag = 'internal scratch']
  %s0 = inlined_call_operand.hbm [shape: f32[16,32], index: 0, kind: input, shape index: {}]
  %s1 = inlined_call_operand.vmem [shape: f32[1,32], index: 1, kind: input, shape index: {}]
  %s2 = inlined_call_operand.vmem [shape: f32[1,32], index: 2, kind: input, shape index: {}]
  %s3 = inlined_call_operand.hbm [shape: f32[16,32], index: 3, kind: output, shape index: {}]
  %s4 = sld [smem:[#allocation0]]
  $region26: #{tpu_custom_call.1} parent=0
    _
  %s6 = ssub.s32 1, %s4
  %s7 = scalar_select 0, %s6, %s4
  $region1: #{tpu_custom_call.1} parent=0
    #allocation2 [shape = 'u8[8192]{0}', space=vmem, size = 0x2000, scoped, tag = 'input window, operand 0, single buffered']
    #allocation3 [shape = 's32[1]{0}', space=sflag, size = 0x4, scoped, tag = 'scoped memory for tpu_custom_call.1']
    #allocation4 [shape = 's32[1]{0}', space=sflag, size = 0x4, scoped, tag = 'scoped memory for tpu_custom_call.1']
    #allocation5 [shape = 'u8[8192]{0}', space=vmem, size = 0x2000, scoped, tag = 'output window, operand 0, single buffered']
    %8 = vsyncpa [#allocation3], 0
    %9 = vsyncpa [#allocation4], 0
    // Predicated region
    $region2: #{tpu_custom_call.1} parent=1 // pred_check
      _
    $region3: #{tpu_custom_call.1} parent=1 // pred_check_branch
      %11 = sbr.rel (0) target = $region5
    $region4: #{tpu_custom_call.1} parent=1 // pred_region
      %s13 = ssub.s32 256, 256
      %14 = vsyncadd [#allocation3], %s13
      %s15 = sshll.u32 [#allocation2], 4
      %s16 = int_to_ptr.vmem [resolvable:$true] %s15
      %21 = dma.hbm_to_vmem [thread:$0]  %s0, 256, %s16, [#allocation3], 128, 128, 8
    $region5: #{tpu_custom_call.1} parent=1 // pred_fallthru
      _
    // Predicated region
    $region6: #{tpu_custom_call.1} parent=1 // pred_check
      _
    $region7: #{tpu_custom_call.1} parent=1 // pred_check_branch
      %23 = sbr.rel (0) target = $region9
    $region8: #{tpu_custom_call.1} parent=1 // pred_region
      _
    $region9: #{tpu_custom_call.1} parent=1 // pred_fallthru
      _
    // Predicated region
    $region10: #{tpu_custom_call.1} parent=1 // pred_check
      _
    $region11: #{tpu_custom_call.1} parent=1 // pred_check_branch
      %25 = sbr.rel (0) target = $region13
    $region12: #{tpu_custom_call.1} parent=1 // pred_region
      _
    $region13: #{tpu_custom_call.1} parent=1 // pred_fallthru
      _
    // Predicated region
    $region14: #{tpu_custom_call.1} parent=1 // pred_check
      _
    $region15: #{tpu_custom_call.1} parent=1 // pred_check_branch
      %27 = sbr.rel (0) target = $region17
    $region16: #{tpu_custom_call.1} parent=1 // pred_region
      %28 = dma.done [#allocation3], 256
    $region17: #{tpu_custom_call.1} parent=1 // pred_fallthru
      _
    %v29 = vld [vmem:[#allocation2] sm:$0xff]
    %v30 = vld [vmem:[#allocation2 + $0x8] sm:$0xff]
    %vm31 = vcmask 261120
    %v32 = vsel %vm31, %v29, 0.0
    %33 = vadd.xlane.f32.xlu0 %v32
    %v34 = vpop.xlane.xlu0 %33
    %v35 = vsel %vm31, %v30, 0.0
    %36 = vadd.xlane.f32.xlu0 %v35
    %v37 = vpop.xlane.xlu0 %36
    %v38 = vmul.f32 %v29, %v29
    %v39 = vmul.f32 %v30, %v30
    %v40 = vsel %vm31, %v38, 0.0
    %41 = vadd.xlane.f32.xlu0 %v40
    %v42 = vpop.xlane.xlu0 %41
    %v43 = vsel %vm31, %v39, 0.0
    %44 = vadd.xlane.f32.xlu0 %v43
    %v45 = vpop.xlane.xlu0 %44
    %v46 = vmul.f32 %v34, 0.03125
    %v47 = vmul.f32 %v37, 0.03125
    %v48 = vmul.f32 %v42, 0.03125
    %v49 = vmul.f32 %v45, 0.03125
    %v50 = vmul.f32 %v46, %v46
    %v51 = vmul.f32 %v47, %v47
    %v52 = vsub.f32 %v48, %v50
    %v53 = vsub.f32 %v49, %v51
    %v54 = vadd.f32 %v52, 1e-05
    %v55 = vadd.f32 %v53, 1e-05
    %v56 = vrsqrt.pop %v54
    %v57 = vrsqrt.pop %v55
    %v58 = vld [vmem:[%s1] sm:$0x1]
    %v59 = vld [vmem:[%s2] sm:$0x1]
    %v60 = vsub.f32 %v29, %v46
    %v61 = vsub.f32 %v30, %v47
    %v62 = vmul.f32 %v60, %v56
    %v63 = vmul.f32 %v61, %v57
    %v65 = vlaneseq
    %v66 = vshrl.u32 %v65, 7
    %v67 = vsub.s32 0, %v66
    %v68 = vrot.slane %v58, %v67
    %v70 = vmul.f32 %v62, %v68
    %v71 = vmul.f32 %v63, %v68
    %v73 = vlaneseq
    %v74 = vshrl.u32 %v73, 7
    %v75 = vsub.s32 0, %v74
    %v76 = vrot.slane %v59, %v75
    %v78 = vadd.f32 %v70, %v76
    %v79 = vadd.f32 %v71, %v76
    %80 = vst.msk [vmem:[#allocation5] sm:$0xff] %vm31, %v78
    %81 = vst.msk [vmem:[#allocation5 + $0x8] sm:$0xff] %vm31, %v79
    // Predicated region
    $region18: #{tpu_custom_call.1} parent=1 // pred_check
      _
    $region19: #{tpu_custom_call.1} parent=1 // pred_check_branch
      %83 = sbr.rel (0) target = $region21
    $region20: #{tpu_custom_call.1} parent=1 // pred_region
      %s85 = ssub.s32 256, 256
      %86 = vsyncadd [#allocation4], %s85
      %s87 = sshll.u32 [#allocation5], 4
      %s88 = int_to_ptr.vmem [resolvable:$true] %s87
      %93 = dma.vmem_to_hbm [thread:$0]  %s88, 256, %s3, [#allocation4], 128, 128, 8
    $region21: #{tpu_custom_call.1} parent=1 // pred_fallthru
      _
    // Predicated region
    $region22: #{tpu_custom_call.1} parent=1 // pred_check
      _
    $region23: #{tpu_custom_call.1} parent=1 // pred_check_branch
      %95 = sbr.rel (0) target = $region25
    $region24: #{tpu_custom_call.1} parent=1 // pred_region
      %96 = dma.done [#allocation4], 256
    $region25: #{tpu_custom_call.1} parent=1 // pred_fallthru
      _
    %97 = vsyncpa [#allocation3], 1
    %98 = vsyncpa [#allocation4], 1

</llo_original>
